<compile_context>
chip_gen: v7x
topology: tpu7x:2x2x1
jax: 0.10.0
libtpu: 0.0.40
codegen_flags: <defaults>
</compile_context>

<pallas_src>
import functools

import jax
import jax.numpy as jnp
from jax.experimental import pallas as pl
from jax.experimental.pallas import tpu as pltpu

BN_EPS = 1e-5


# ---------------------------------------------------------------------------
# Fused Pallas kernel (one batch element per grid step, channel-major)
# ---------------------------------------------------------------------------
def _bottleneck_kernel(x_ref, w1_ref, b1_ref, w2_ref, b2_ref, w3_ref, b3_ref,
                       mask_ref, *rest, h, w, stride, use_residual):
    """Fused inverted-residual block (C on sublanes, H*W on lanes).

    x_ref    : (1, Cin, H*W)     input, matmul dtype (bf16 by default)
    w1_ref   : (Cmid, Cin)       1x1 expand weights, BN scale folded in
    b1_ref   : (Cmid, 1)         folded BN bias (f32)
    w2_ref   : (Cmid, 9)         3x3 depthwise taps (tap = kh*3 + kw), BN folded
    b2_ref   : (Cmid, 1)         f32
    w3_ref   : (Cout, Cmid)      1x1 project weights, BN folded
    b3_ref   : (Cout, 1)         f32
    mask_ref : (9, H*W)          per-tap in-image mask (f32 0/1)
    rest     : (o_ref,)                   for stride == 1
               (sel_ref, o_ref)           for stride  > 1, sel: (H*W, Ho*Wo) f32
    o_ref    : (1, Cout, Hout*Wout)
    """
    if stride == 1:
        (o_ref,) = rest
        sel_ref = None
    else:
        sel_ref, o_ref = rest
    hw = h * w

    xb = x_ref[0]                                             # (Cin, H*W)

    # ---- conv1: 1x1 expand (bf16 MXU, f32 acc) + BN bias + ReLU6 -----------
    m = jnp.dot(w1_ref[...], xb, preferred_element_type=jnp.float32)
    m = jnp.clip(m + b1_ref[...], 0.0, 6.0)                   # (Cmid, H*W) f32

    # ---- dwconv2: 3x3 depthwise as 9 rolled MACs (XLU roll + VPU MAC) ------
    acc = m * w2_ref[:, 4:5]                                  # center tap (0, 0)
    for dh in (-1, 0, 1):
        for dw in (-1, 0, 1):
            if dh == 0 and dw == 0:
                continue
            t = (dh + 1) * 3 + (dw + 1)
            # shifted[p] == m[p + dh*W + dw]  (pltpu.roll follows jnp.roll).
            shift = (-(dh * w + dw)) % hw
            v = pltpu.roll(m, shift, axis=1)
            v = v * mask_ref[t:t + 1, :]                      # zero out-of-image taps
            acc = acc + v * w2_ref[:, t:t + 1]
    m2 = jnp.clip(acc + b2_ref[...], 0.0, 6.0)                # (Cmid, H*W) f32

    if stride != 1:
        # Subsample to the strided output grid with a tiny 0/1 selection matmul.
        m2 = jnp.dot(m2, sel_ref[...], preferred_element_type=jnp.float32)

    # ---- conv3: 1x1 project (bf16 MXU, f32 acc) + BN bias (+ residual) -----
    y = jnp.dot(w3_ref[...], m2.astype(w3_ref.dtype),
                preferred_element_type=jnp.float32)
    y = y + b3_ref[...]                                       # (Cout, Ho*Wo)
    if use_residual:
        y = y + xb.astype(jnp.float32)
    o_ref[0] = y.astype(o_ref.dtype)


# ---------------------------------------------------------------------------
# Trace-time helpers: BN folding, channel-major weight layout, masks
# ---------------------------------------------------------------------------
def fold_bn(gamma, beta, mean, var):
    scale = gamma / jnp.sqrt(var + BN_EPS)
    bias = beta - mean * scale
    return scale, bias


def prepare_params(params, matmul_dtype=jnp.bfloat16):
    """Fold eval-mode BN into the conv weights; lay them out channel-major."""
    cin, cmid = params["w1"].shape
    cout = params["w3"].shape[1]
    w1 = (params["w1"] * params["s1"][None, :]).T.astype(matmul_dtype)       # (Cmid, Cin)
    w2 = (params["w2"] * params["s2"][None, None, :]).reshape(9, cmid).T     # (Cmid, 9)
    w3 = (params["w3"] * params["s3"][None, :]).T.astype(matmul_dtype)       # (Cout, Cmid)
    return dict(
        w1=w1,
        b1=params["b1"].reshape(cmid, 1).astype(jnp.float32),
        w2=w2.astype(jnp.float32),
        b2=params["b2"].reshape(cmid, 1).astype(jnp.float32),
        w3=w3,
        b3=params["b3"].reshape(cout, 1).astype(jnp.float32),
    )


def _tap_masks(h, w):
    """(9, H*W) f32: mask[t, p] == 1 iff tap t of a padded 3x3 conv at flat
    position p reads an in-image pixel (tap t = (dh+1)*3 + (dw+1))."""
    pos = jnp.arange(h * w, dtype=jnp.int32)
    row, col = pos // w, pos % w
    masks = []
    for dh in (-1, 0, 1):
        for dw in (-1, 0, 1):
            ok = ((row + dh >= 0) & (row + dh < h) &
                  (col + dw >= 0) & (col + dw < w))
            masks.append(ok)
    return jnp.stack(masks, axis=0).astype(jnp.float32)


def _subsample_matrix(h, w, stride):
    """(H*W, Hout*Wout) 0/1 matrix selecting the strided output centers."""
    hout = (h + 2 - 3) // stride + 1
    wout = (w + 2 - 3) // stride + 1
    src = ((jnp.arange(hout) * stride)[:, None] * w
           + (jnp.arange(wout) * stride)[None, :]).reshape(-1)
    return (jnp.arange(h * w)[:, None] == src[None, :]).astype(jnp.float32)


# ---------------------------------------------------------------------------
# Wrapper: pallas_call
# ---------------------------------------------------------------------------
def bottleneck_forward(x_nchw, params, *, stride, matmul_dtype=jnp.bfloat16):
    n, cin, h, w = x_nchw.shape
    cmid = params["w1"].shape[1]
    cout = params["w3"].shape[1]
    use_residual = (stride == 1) and (cin == cout)
    hw = h * w
    hout = (h + 2 - 3) // stride + 1
    wout = (w + 2 - 3) // stride + 1
    hw_out = hout * wout

    prep = prepare_params(params, matmul_dtype)
    masks = _tap_masks(h, w)
    # NCHW stays NCHW; spatial is flattened so loads/stores/rolls are lane-dense
    # (H*W on lanes; multiples of 128 keep rolls on whole vregs).
    x_flat = x_nchw.reshape(n, cin, hw).astype(matmul_dtype)

    inputs = [x_flat, prep["w1"], prep["b1"], prep["w2"], prep["b2"],
              prep["w3"], prep["b3"], masks]
    in_specs = [
        pl.BlockSpec((1, cin, hw), lambda b: (b, 0, 0)),
        pl.BlockSpec((cmid, cin), lambda b: (0, 0)),
        pl.BlockSpec((cmid, 1), lambda b: (0, 0)),
        pl.BlockSpec((cmid, 9), lambda b: (0, 0)),
        pl.BlockSpec((cmid, 1), lambda b: (0, 0)),
        pl.BlockSpec((cout, cmid), lambda b: (0, 0)),
        pl.BlockSpec((cout, 1), lambda b: (0, 0)),
        pl.BlockSpec((9, hw), lambda b: (0, 0)),
    ]
    if stride != 1:
        inputs.append(_subsample_matrix(h, w, stride))
        in_specs.append(pl.BlockSpec((hw, hw_out), lambda b: (0, 0)))

    kernel = functools.partial(_bottleneck_kernel, h=h, w=w, stride=stride,
                               use_residual=use_residual)

    # Advisory cost estimate so XLA can schedule around the custom call.
    itemsize = jnp.dtype(matmul_dtype).itemsize
    flops = n * (2 * hw * cin * cmid + 18 * hw * cmid + 2 * hw_out * cmid * cout)
    if stride != 1:
        flops += n * 2 * hw * hw_out * cmid
    bytes_accessed = (n * cin * hw * itemsize
                      + (cmid * cin + cout * cmid) * itemsize
                      + (cmid * 9 + 9 * hw + 2 * cmid + cout) * 4
                      + n * cout * hw_out * x_nchw.dtype.itemsize)

    # Live channel-major f32 intermediates + double-buffered I/O blocks,
    # clamped to stay inside v7x's 64 MiB physical VMEM (default scoped limit
    # is 16/32 MiB, which large MBv2 stages would overflow).
    vmem_est = (6 * cmid * hw * 4
                + 2 * (cin * hw * itemsize + cout * hw_out * 4)
                + (cmid * cin + cout * cmid) * itemsize
                + (cmid * 9 + 9 * hw) * 4)
    if stride != 1:
        vmem_est += hw * hw_out * 4
    vmem_limit = int(min(64 * 2**20, max(32 * 2**20, 2 * vmem_est)))

    out_flat = pl.pallas_call(
        kernel,
        out_shape=jax.ShapeDtypeStruct((n, cout, hw_out), x_nchw.dtype),
        grid=(n,),
        in_specs=in_specs,
        out_specs=pl.BlockSpec((1, cout, hw_out), lambda b: (b, 0, 0)),
        compiler_params=pltpu.CompilerParams(
            dimension_semantics=("parallel",),
            vmem_limit_bytes=vmem_limit),
        cost_estimate=pl.CostEstimate(
            flops=flops, transcendentals=0, bytes_accessed=bytes_accessed),
    )(*inputs)

    return out_flat.reshape(n, cout, hout, wout)


# ---------------------------------------------------------------------------
# Deterministic parameter construction (eval-mode BN -> scale/bias)
# ---------------------------------------------------------------------------
def make_params(key, in_channels, out_channels, expansion_factor):
    mid = in_channels * expansion_factor
    ks = jax.random.split(key, 12)

    def bn(kg, kb, km, kv, c):
        gamma = 1.0 + 0.1 * jax.random.normal(kg, (c,), jnp.float32)
        beta = 0.1 * jax.random.normal(kb, (c,), jnp.float32)
        mean = 0.1 * jax.random.normal(km, (c,), jnp.float32)
        var = 0.5 + jnp.abs(jax.random.normal(kv, (c,), jnp.float32))
        return fold_bn(gamma, beta, mean, var)

    # PyTorch conv1 weight (mid, in, 1, 1) -> (in, mid)
    w1 = 0.2 * jax.random.normal(ks[0], (in_channels, mid), jnp.float32)
    s1, b1 = bn(ks[1], ks[2], ks[3], ks[4], mid)
    # PyTorch dwconv2 weight (mid, 1, 3, 3) -> (3, 3, mid)
    w2 = 0.2 * jax.random.normal(ks[5], (3, 3, mid), jnp.float32)
    s2, b2 = bn(ks[6], ks[7], ks[8], ks[9], mid)
    # PyTorch conv3 weight (out, mid, 1, 1) -> (mid, out)
    w3 = 0.2 * jax.random.normal(ks[10], (mid, out_channels), jnp.float32)
    s3, b3 = bn(ks[11], ks[0], ks[1], ks[2], out_channels)

    return dict(w1=w1, s1=s1, b1=b1, w2=w2, s2=s2, b2=b2, w3=w3, s3=s3, b3=b3)


# ---------------------------------------------------------------------------
# Pure-JAX reference (same BN folding & matmul precision; correctness check)
# ---------------------------------------------------------------------------
def reference_forward(x_nchw, params, *, stride, matmul_dtype=jnp.bfloat16):
    n, cin, h, w = x_nchw.shape
    cmid = params["w1"].shape[1]
    cout = params["w3"].shape[1]
    use_residual = (stride == 1) and (cin == cout)
    hout = (h + 2 - 3) // stride + 1
    wout = (w + 2 - 3) // stride + 1

    prep = prepare_params(params, matmul_dtype)
    x16 = x_nchw.reshape(n, cin, h * w).astype(matmul_dtype)

    m = jnp.einsum("mc,ncp->nmp", prep["w1"], x16,
                   preferred_element_type=jnp.float32)
    m = jnp.clip(m + prep["b1"][None], 0.0, 6.0)              # (N, Cmid, H*W)

    mp = jnp.pad(m.reshape(n, cmid, h, w), ((0, 0), (0, 0), (1, 1), (1, 1)))
    acc = jnp.zeros((n, cmid, hout, wout), jnp.float32)
    for kh in range(3):
        for kw in range(3):
            patch = mp[:, :, kh:kh + (hout - 1) * stride + 1:stride,
                       kw:kw + (wout - 1) * stride + 1:stride]
            acc = acc + patch * prep["w2"][None, :, kh * 3 + kw, None, None]
    m2 = jnp.clip(acc + prep["b2"][None, :, :, None], 0.0, 6.0)
    m2 = m2.reshape(n, cmid, hout * wout).astype(matmul_dtype)

    y = jnp.einsum("om,nmp->nop", prep["w3"], m2,
                   preferred_element_type=jnp.float32) + prep["b3"][None]
    if use_residual:
        y = y + x16.astype(jnp.float32)
    return y.reshape(n, cout, hout, wout).astype(x_nchw.dtype)


if __name__ == "__main__":
    key = jax.random.PRNGKey(0)
    TOL = dict(rtol=3e-2, atol=3e-2)   # bf16 matmul operands

    # Case 1: Bottleneck(8, 8, expansion=2, stride=1) -> residual path.
    kx, kp, key = jax.random.split(key, 3)
    x = jax.random.normal(kx, (2, 8, 16, 16), jnp.float32)
    params = make_params(kp, 8, 8, 2)
    out = jax.block_until_ready(bottleneck_forward(x, params, stride=1))
    ref = reference_forward(x, params, stride=1)
    assert out.shape == ref.shape == (2, 8, 16, 16)
    assert jnp.allclose(out, ref, **TOL), "mismatch (residual case)"

    # Case 2: Bottleneck(8, 16, expansion=4, stride=1) -> projection, no residual.
    kx2, kp2, key = jax.random.split(key, 3)
    x2 = jax.random.normal(kx2, (2, 8, 16, 8), jnp.float32)
    params2 = make_params(kp2, 8, 16, 4)
    out2 = jax.block_until_ready(bottleneck_forward(x2, params2, stride=1))
    ref2 = reference_forward(x2, params2, stride=1)
    assert out2.shape == ref2.shape == (2, 16, 16, 8)
    assert jnp.allclose(out2, ref2, **TOL), "mismatch (projection case)"

    # Case 3: Bottleneck(8, 16, expansion=4, stride=2) -> downsampling.
    kx3, kp3 = jax.random.split(key)
    x3 = jax.random.normal(kx3, (2, 8, 16, 16), jnp.float32)
    params3 = make_params(kp3, 8, 16, 4)
    out3 = jax.block_until_ready(bottleneck_forward(x3, params3, stride=2))
    ref3 = reference_forward(x3, params3, stride=2)
    assert out3.shape == ref3.shape == (2, 16, 8, 8)
    assert jnp.allclose(out3, ref3, **TOL), "mismatch (stride-2 case)"

    print("KERNEL_OK")
</pallas_src>

<mosaic_0001>
module attributes {stable_mosaic.version = 11 : i64} {
  func.func @_bottleneck_kernel(%arg0: i32, %arg1: memref<1x8x256xbf16, #tpu.memory_space<vmem>>, %arg2: memref<16x8xbf16, #tpu.memory_space<vmem>>, %arg3: memref<16x1xf32, #tpu.memory_space<vmem>>, %arg4: memref<16x9xf32, #tpu.memory_space<vmem>>, %arg5: memref<16x1xf32, #tpu.memory_space<vmem>>, %arg6: memref<8x16xbf16, #tpu.memory_space<vmem>>, %arg7: memref<8x1xf32, #tpu.memory_space<vmem>>, %arg8: memref<9x256xf32, #tpu.memory_space<vmem>>, %arg9: memref<1x8x256xf32, #tpu.memory_space<vmem>>) attributes {dimension_semantics = [#tpu.dimension_semantics<parallel>], iteration_bounds = array<i64: 2>, scalar_prefetch = 0 : i64, scratch_operands = 0 : i64, tpu.core_type = #tpu.core_type<tc>, window_params = [{transform_indices = @transform_0, window_bounds = array<i64: 1, 8, 256>}, {pipeline_mode = #tpu.pipeline_mode<synchronous>, transform_indices = @transform_1, window_bounds = array<i64: 16, 8>}, {pipeline_mode = #tpu.pipeline_mode<synchronous>, transform_indices = @transform_2, window_bounds = array<i64: 16, 1>}, {pipeline_mode = #tpu.pipeline_mode<synchronous>, transform_indices = @transform_3, window_bounds = array<i64: 16, 9>}, {pipeline_mode = #tpu.pipeline_mode<synchronous>, transform_indices = @transform_4, window_bounds = array<i64: 16, 1>}, {pipeline_mode = #tpu.pipeline_mode<synchronous>, transform_indices = @transform_5, window_bounds = array<i64: 8, 16>}, {pipeline_mode = #tpu.pipeline_mode<synchronous>, transform_indices = @transform_6, window_bounds = array<i64: 8, 1>}, {pipeline_mode = #tpu.pipeline_mode<synchronous>, transform_indices = @transform_7, window_bounds = array<i64: 9, 256>}, {transform_indices = @transform_8, window_bounds = array<i64: 1, 8, 256>}]} {
    %c0 = arith.constant 0 : index
    %c0_0 = arith.constant 0 : index
    %c0_1 = arith.constant 0 : index
    %0 = vector.load %arg1[%c0, %c0_0, %c0_1] : memref<1x8x256xbf16, #tpu.memory_space<vmem>>, vector<1x8x256xbf16>
    %1 = vector.shape_cast %0 : vector<1x8x256xbf16> to vector<8x256xbf16>
    %c0_2 = arith.constant 0 : index
    %c0_3 = arith.constant 0 : index
    %2 = vector.load %arg2[%c0_2, %c0_3] : memref<16x8xbf16, #tpu.memory_space<vmem>>, vector<16x8xbf16>
    %cst = arith.constant dense<0.000000e+00> : vector<16x256xf32>
    %3 = tpu.matmul %2, %1, %cst {dimension_numbers = #tpu.dot_dimension_numbers<[1], [0], [0], [1], [0, 0, 1, 1], [], []>} : vector<16x8xbf16>, vector<8x256xbf16>, vector<16x256xf32> -> vector<16x256xf32>
    %c0_4 = arith.constant 0 : index
    %c0_5 = arith.constant 0 : index
    %4 = vector.load %arg3[%c0_4, %c0_5] : memref<16x1xf32, #tpu.memory_space<vmem>>, vector<16x1xf32>
    %5 = vector.broadcast %4 : vector<16x1xf32> to vector<16x256xf32>
    %6 = arith.addf %3, %5 : vector<16x256xf32>
    %cst_6 = arith.constant 0.000000e+00 : f32
    %cst_7 = arith.constant 6.000000e+00 : f32
    %7 = vector.broadcast %cst_6 : f32 to vector<16x256xf32>
    %8 = arith.maximumf %7, %6 : vector<16x256xf32>
    %9 = vector.broadcast %cst_7 : f32 to vector<16x256xf32>
    %10 = arith.minimumf %9, %8 : vector<16x256xf32>
    %c0_8 = arith.constant 0 : index
    %c4 = arith.constant 4 : index
    %11 = vector.load %arg4[%c0_8, %c4] : memref<16x9xf32, #tpu.memory_space<vmem>>, vector<16x1xf32>
    %12 = vector.broadcast %11 : vector<16x1xf32> to vector<16x256xf32>
    %13 = arith.mulf %10, %12 : vector<16x256xf32>
    %c17_i32 = arith.constant 17 : i32
    %14 = tpu.dynamic_rotate %10 by %c17_i32 dim 1 : vector<16x256xf32>, i32 -> vector<16x256xf32>
    %c0_9 = arith.constant 0 : index
    %c0_10 = arith.constant 0 : index
    %15 = vector.load %arg8[%c0_9, %c0_10] : memref<9x256xf32, #tpu.memory_space<vmem>>, vector<1x256xf32>
    %16 = vector.broadcast %15 : vector<1x256xf32> to vector<16x256xf32>
    %17 = arith.mulf %14, %16 : vector<16x256xf32>
    %c0_11 = arith.constant 0 : index
    %c0_12 = arith.constant 0 : index
    %18 = vector.load %arg4[%c0_11, %c0_12] : memref<16x9xf32, #tpu.memory_space<vmem>>, vector<16x1xf32>
    %19 = vector.broadcast %18 : vector<16x1xf32> to vector<16x256xf32>
    %20 = arith.mulf %17, %19 : vector<16x256xf32>
    %21 = arith.addf %13, %20 : vector<16x256xf32>
    %c16_i32 = arith.constant 16 : i32
    %22 = tpu.dynamic_rotate %10 by %c16_i32 dim 1 : vector<16x256xf32>, i32 -> vector<16x256xf32>
    %c1 = arith.constant 1 : index
    %c0_13 = arith.constant 0 : index
    %23 = vector.load %arg8[%c1, %c0_13] : memref<9x256xf32, #tpu.memory_space<vmem>>, vector<1x256xf32>
    %24 = vector.broadcast %23 : vector<1x256xf32> to vector<16x256xf32>
    %25 = arith.mulf %22, %24 : vector<16x256xf32>
    %c0_14 = arith.constant 0 : index
    %c1_15 = arith.constant 1 : index
    %26 = vector.load %arg4[%c0_14, %c1_15] : memref<16x9xf32, #tpu.memory_space<vmem>>, vector<16x1xf32>
    %27 = vector.broadcast %26 : vector<16x1xf32> to vector<16x256xf32>
    %28 = arith.mulf %25, %27 : vector<16x256xf32>
    %29 = arith.addf %21, %28 : vector<16x256xf32>
    %c15_i32 = arith.constant 15 : i32
    %30 = tpu.dynamic_rotate %10 by %c15_i32 dim 1 : vector<16x256xf32>, i32 -> vector<16x256xf32>
    %c2 = arith.constant 2 : index
    %c0_16 = arith.constant 0 : index
    %31 = vector.load %arg8[%c2, %c0_16] : memref<9x256xf32, #tpu.memory_space<vmem>>, vector<1x256xf32>
    %32 = vector.broadcast %31 : vector<1x256xf32> to vector<16x256xf32>
    %33 = arith.mulf %30, %32 : vector<16x256xf32>
    %c0_17 = arith.constant 0 : index
    %c2_18 = arith.constant 2 : index
    %34 = vector.load %arg4[%c0_17, %c2_18] : memref<16x9xf32, #tpu.memory_space<vmem>>, vector<16x1xf32>
    %35 = vector.broadcast %34 : vector<16x1xf32> to vector<16x256xf32>
    %36 = arith.mulf %33, %35 : vector<16x256xf32>
    %37 = arith.addf %29, %36 : vector<16x256xf32>
    %c1_i32 = arith.constant 1 : i32
    %38 = tpu.dynamic_rotate %10 by %c1_i32 dim 1 : vector<16x256xf32>, i32 -> vector<16x256xf32>
    %c3 = arith.constant 3 : index
    %c0_19 = arith.constant 0 : index
    %39 = vector.load %arg8[%c3, %c0_19] : memref<9x256xf32, #tpu.memory_space<vmem>>, vector<1x256xf32>
    %40 = vector.broadcast %39 : vector<1x256xf32> to vector<16x256xf32>
    %41 = arith.mulf %38, %40 : vector<16x256xf32>
    %c0_20 = arith.constant 0 : index
    %c3_21 = arith.constant 3 : index
    %42 = vector.load %arg4[%c0_20, %c3_21] : memref<16x9xf32, #tpu.memory_space<vmem>>, vector<16x1xf32>
    %43 = vector.broadcast %42 : vector<16x1xf32> to vector<16x256xf32>
    %44 = arith.mulf %41, %43 : vector<16x256xf32>
    %45 = arith.addf %37, %44 : vector<16x256xf32>
    %c255_i32 = arith.constant 255 : i32
    %46 = tpu.dynamic_rotate %10 by %c255_i32 dim 1 : vector<16x256xf32>, i32 -> vector<16x256xf32>
    %c5 = arith.constant 5 : index
    %c0_22 = arith.constant 0 : index
    %47 = vector.load %arg8[%c5, %c0_22] : memref<9x256xf32, #tpu.memory_space<vmem>>, vector<1x256xf32>
    %48 = vector.broadcast %47 : vector<1x256xf32> to vector<16x256xf32>
    %49 = arith.mulf %46, %48 : vector<16x256xf32>
    %c0_23 = arith.constant 0 : index
    %c5_24 = arith.constant 5 : index
    %50 = vector.load %arg4[%c0_23, %c5_24] : memref<16x9xf32, #tpu.memory_space<vmem>>, vector<16x1xf32>
    %51 = vector.broadcast %50 : vector<16x1xf32> to vector<16x256xf32>
    %52 = arith.mulf %49, %51 : vector<16x256xf32>
    %53 = arith.addf %45, %52 : vector<16x256xf32>
    %c241_i32 = arith.constant 241 : i32
    %54 = tpu.dynamic_rotate %10 by %c241_i32 dim 1 : vector<16x256xf32>, i32 -> vector<16x256xf32>
    %c6 = arith.constant 6 : index
    %c0_25 = arith.constant 0 : index
    %55 = vector.load %arg8[%c6, %c0_25] : memref<9x256xf32, #tpu.memory_space<vmem>>, vector<1x256xf32>
    %56 = vector.broadcast %55 : vector<1x256xf32> to vector<16x256xf32>
    %57 = arith.mulf %54, %56 : vector<16x256xf32>
    %c0_26 = arith.constant 0 : index
    %c6_27 = arith.constant 6 : index
    %58 = vector.load %arg4[%c0_26, %c6_27] : memref<16x9xf32, #tpu.memory_space<vmem>>, vector<16x1xf32>
    %59 = vector.broadcast %58 : vector<16x1xf32> to vector<16x256xf32>
    %60 = arith.mulf %57, %59 : vector<16x256xf32>
    %61 = arith.addf %53, %60 : vector<16x256xf32>
    %c240_i32 = arith.constant 240 : i32
    %62 = tpu.dynamic_rotate %10 by %c240_i32 dim 1 : vector<16x256xf32>, i32 -> vector<16x256xf32>
    %c7 = arith.constant 7 : index
    %c0_28 = arith.constant 0 : index
    %63 = vector.load %arg8[%c7, %c0_28] : memref<9x256xf32, #tpu.memory_space<vmem>>, vector<1x256xf32>
    %64 = vector.broadcast %63 : vector<1x256xf32> to vector<16x256xf32>
    %65 = arith.mulf %62, %64 : vector<16x256xf32>
    %c0_29 = arith.constant 0 : index
    %c7_30 = arith.constant 7 : index
    %66 = vector.load %arg4[%c0_29, %c7_30] : memref<16x9xf32, #tpu.memory_space<vmem>>, vector<16x1xf32>
    %67 = vector.broadcast %66 : vector<16x1xf32> to vector<16x256xf32>
    %68 = arith.mulf %65, %67 : vector<16x256xf32>
    %69 = arith.addf %61, %68 : vector<16x256xf32>
    %c239_i32 = arith.constant 239 : i32
    %70 = tpu.dynamic_rotate %10 by %c239_i32 dim 1 : vector<16x256xf32>, i32 -> vector<16x256xf32>
    %c8 = arith.constant 8 : index
    %c0_31 = arith.constant 0 : index
    %71 = vector.load %arg8[%c8, %c0_31] : memref<9x256xf32, #tpu.memory_space<vmem>>, vector<1x256xf32>
    %72 = vector.broadcast %71 : vector<1x256xf32> to vector<16x256xf32>
    %73 = arith.mulf %70, %72 : vector<16x256xf32>
    %c0_32 = arith.constant 0 : index
    %c8_33 = arith.constant 8 : index
    %74 = vector.load %arg4[%c0_32, %c8_33] : memref<16x9xf32, #tpu.memory_space<vmem>>, vector<16x1xf32>
    %75 = vector.broadcast %74 : vector<16x1xf32> to vector<16x256xf32>
    %76 = arith.mulf %73, %75 : vector<16x256xf32>
    %77 = arith.addf %69, %76 : vector<16x256xf32>
    %c0_34 = arith.constant 0 : index
    %c0_35 = arith.constant 0 : index
    %78 = vector.load %arg5[%c0_34, %c0_35] : memref<16x1xf32, #tpu.memory_space<vmem>>, vector<16x1xf32>
    %79 = vector.broadcast %78 : vector<16x1xf32> to vector<16x256xf32>
    %80 = arith.addf %77, %79 : vector<16x256xf32>
    %cst_36 = arith.constant 0.000000e+00 : f32
    %cst_37 = arith.constant 6.000000e+00 : f32
    %81 = vector.broadcast %cst_36 : f32 to vector<16x256xf32>
    %82 = arith.maximumf %81, %80 : vector<16x256xf32>
    %83 = vector.broadcast %cst_37 : f32 to vector<16x256xf32>
    %84 = arith.minimumf %83, %82 : vector<16x256xf32>
    %c0_38 = arith.constant 0 : index
    %c0_39 = arith.constant 0 : index
    %85 = vector.load %arg6[%c0_38, %c0_39] : memref<8x16xbf16, #tpu.memory_space<vmem>>, vector<8x16xbf16>
    %86 = arith.truncf %84 : vector<16x256xf32> to vector<16x256xbf16>
    %cst_40 = arith.constant dense<0.000000e+00> : vector<8x256xf32>
    %87 = tpu.matmul %85, %86, %cst_40 {dimension_numbers = #tpu.dot_dimension_numbers<[1], [0], [0], [1], [0, 0, 1, 1], [], []>} : vector<8x16xbf16>, vector<16x256xbf16>, vector<8x256xf32> -> vector<8x256xf32>
    %c0_41 = arith.constant 0 : index
    %c0_42 = arith.constant 0 : index
    %88 = vector.load %arg7[%c0_41, %c0_42] : memref<8x1xf32, #tpu.memory_space<vmem>>, vector<8x1xf32>
    %89 = vector.broadcast %88 : vector<8x1xf32> to vector<8x256xf32>
    %90 = arith.addf %87, %89 : vector<8x256xf32>
    %91 = arith.extf %1 : vector<8x256xbf16> to vector<8x256xf32>
    %92 = arith.addf %90, %91 : vector<8x256xf32>
    %c0_43 = arith.constant 0 : index
    %c0_44 = arith.constant 0 : index
    %c0_45 = arith.constant 0 : index
    %93 = vector.load %arg9[%c0_43, %c0_44, %c0_45] : memref<1x8x256xf32, #tpu.memory_space<vmem>>, vector<1x8x256xf32>
    %94 = vector.shape_cast %93 : vector<1x8x256xf32> to vector<8x256xf32>
    %95 = vector.shape_cast %92 : vector<8x256xf32> to vector<1x8x256xf32>
    tpu.vector_store %arg9[%c0_43, %c0_44, %c0_45], %95 {strides = array<i32>} : memref<1x8x256xf32, #tpu.memory_space<vmem>>, vector<1x8x256xf32>,
    return
  }
  func.func @transform_0(%arg0: i32) -> (i32, i32, i32) {
    %c0_i32 = arith.constant 0 : i32
    %c0_i32_0 = arith.constant 0 : i32
    %c0_i32_1 = arith.constant 0 : i32
    return %arg0, %c0_i32, %c0_i32_0 : i32, i32, i32
  }
  func.func @transform_1(%arg0: i32) -> (i32, i32) {
    %c0_i32 = arith.constant 0 : i32
    %c0_i32_0 = arith.constant 0 : i32
    %c0_i32_1 = arith.constant 0 : i32
    return %c0_i32, %c0_i32_0 : i32, i32
  }
  func.func @transform_2(%arg0: i32) -> (i32, i32) {
    %c0_i32 = arith.constant 0 : i32
    %c0_i32_0 = arith.constant 0 : i32
    %c0_i32_1 = arith.constant 0 : i32
    return %c0_i32, %c0_i32_0 : i32, i32
  }
  func.func @transform_3(%arg0: i32) -> (i32, i32) {
    %c0_i32 = arith.constant 0 : i32
    %c0_i32_0 = arith.constant 0 : i32
    %c0_i32_1 = arith.constant 0 : i32
    return %c0_i32, %c0_i32_0 : i32, i32
  }
  func.func @transform_4(%arg0: i32) -> (i32, i32) {
    %c0_i32 = arith.constant 0 : i32
    %c0_i32_0 = arith.constant 0 : i32
    %c0_i32_1 = arith.constant 0 : i32
    return %c0_i32, %c0_i32_0 : i32, i32
  }
  func.func @transform_5(%arg0: i32) -> (i32, i32) {
    %c0_i32 = arith.constant 0 : i32
    %c0_i32_0 = arith.constant 0 : i32
    %c0_i32_1 = arith.constant 0 : i32
    return %c0_i32, %c0_i32_0 : i32, i32
  }
  func.func @transform_6(%arg0: i32) -> (i32, i32) {
    %c0_i32 = arith.constant 0 : i32
    %c0_i32_0 = arith.constant 0 : i32
    %c0_i32_1 = arith.constant 0 : i32
    return %c0_i32, %c0_i32_0 : i32, i32
  }
  func.func @transform_7(%arg0: i32) -> (i32, i32) {
    %c0_i32 = arith.constant 0 : i32
    %c0_i32_0 = arith.constant 0 : i32
    %c0_i32_1 = arith.constant 0 : i32
    return %c0_i32, %c0_i32_0 : i32, i32
  }
  func.func @transform_8(%arg0: i32) -> (i32, i32, i32) {
    %c0_i32 = arith.constant 0 : i32
    %c0_i32_0 = arith.constant 0 : i32
    %c0_i32_1 = arith.constant 0 : i32
    return %arg0, %c0_i32, %c0_i32_0 : i32, i32, i32
  }
}

</mosaic_0001>

<llo_original>
// kernel: tpu_custom_call.1
$region0: #{tpu_custom_call.1}
  #allocation0 [shape = 'u32[]', space=smem, size = 0x4, offset = 0x4, fixed_abs, tag = 'smem constant byte address 0x4 - core index']
  #allocation1 [shape = 'u32[144,128]{1,0:T(1,128)}', space=vmem, size = 0x12000, scoped, tag = 'internal scratch']
  %s0 = inlined_call_operand.vmem [shape: bf16[2,8,256], index: 0, kind: input, shape index: {}]
  %s1 = inlined_call_operand.vmem [shape: bf16[16,8], index: 1, kind: input, shape index: {}]
  %s2 = inlined_call_operand.vmem [shape: f32[16,1], index: 2, kind: input, shape index: {}]
  %s3 = inlined_call_operand.vmem [shape: f32[16,9], index: 3, kind: input, shape index: {}]
  %s4 = inlined_call_operand.vmem [shape: f32[16,1], index: 4, kind: input, shape index: {}]
  %s5 = inlined_call_operand.vmem [shape: bf16[8,16], index: 5, kind: input, shape index: {}]
  %s6 = inlined_call_operand.vmem [shape: f32[8,1], index: 6, kind: input, shape index: {}]
  %s7 = inlined_call_operand.vmem [shape: f32[9,256], index: 7, kind: input, shape index: {}]
  %s8 = inlined_call_operand.hbm [shape: f32[2,8,256], index: 8, kind: output, shape index: {}]
  %s9 = sld [smem:[#allocation0]]
  $region65: #{tpu_custom_call.1} parent=0
    _
  %s11 = ssub.s32 1, %s9
  %s12 = scalar_select 0, %s11, %s9
  $region1: #{tpu_custom_call.1} parent=0
    #allocation2 [shape = 'u8[16384]{0}', space=vmem, size = 0x4000, scoped, tag = 'output window, operand 0']
    #allocation3 [shape = 's32[2]{0}', space=sflag, size = 0x8, scoped, tag = 'scoped memory for tpu_custom_call.1']
    %13 = vsyncpa [#allocation3], 0
    %s14 = scalar_lea.sflag [#allocation3], 1
    %15 = vsyncpa %s14, 0
    loop: start=0, step=1, limit=4
    $region2: #{tpu_custom_call.1} parent=1 // loop_pre_header
      _
    $region3: #{tpu_custom_call.1} parent=1 // loop_header
      %s17 = sphi 0, %s21
      %p18 = scmp.ge.s32.totalorder %s17, 4
      %s27 = sphi 0, %s29
      %s30 = sphi 0, %s27
      %s31 = sphi 0, %s30
      %s47 = sphi 0, %s31
      %s51 = sphi 0, %s51
      %s53 = sphi 0, %s51
      %s54 = sphi 0, %s53
      %s68 = sphi 0, %s54
      %s72 = sphi 0, %s72
      %s74 = sphi 0, %s72
      %s75 = sphi 0, %s74
      %s89 = sphi 0, %s75
      %s93 = sphi 0, %s93
      %s95 = sphi 0, %s93
      %s96 = sphi 0, %s95
      %s110 = sphi 0, %s96
      %s114 = sphi 0, %s114
      %s116 = sphi 0, %s114
      %s117 = sphi 0, %s116
      %s131 = sphi 0, %s117
      %s135 = sphi 0, %s135
      %s137 = sphi 0, %s135
      %s138 = sphi 0, %s137
      %s152 = sphi 0, %s138
      %s156 = sphi 0, %s156
      %s158 = sphi 0, %s156
      %s159 = sphi 0, %s158
      %s173 = sphi 0, %s159
      %s177 = sphi 0, %s177
      %s179 = sphi 0, %s177
      %s180 = sphi 0, %s179
      %s194 = sphi 0, %s180
      %s200 = sphi 0, %s202
      %s203 = sphi 0, %s200
      %s204 = sphi 0, %s203
      %s220 = sphi 0, %s204
    $region4: #{tpu_custom_call.1} parent=1 // loop_header_branch
      %20 = sbr.rel (%p18) target = $region8
    $region5: #{tpu_custom_call.1} parent=1 // loop_body
      %s22 = ssub.s32 %s17, 1
      %s23 = ssub.s32 %s17, 2
      %s24 = sadd.s32 %s17, 1
      %s25 = ssub.s32 %s17, %s24
      %p26 = scmp.eq.s32.totalorder %s25, 0
      %s28 = sadd.s32 %s27, 1
      %s29 = scalar_select %p26, %s27, %s28
      %p32 = pneg %p26
      %p33 = scmp.eq.s32.totalorder %s17, 1
      %p34 = por %p32, %p33
      %p35 = scmp.ne.s32.totalorder %s27, %s30
      %p36 = scmp.eq.s32.totalorder %s17, 0
      %p37 = por %p35, %p36
      %p38 = scmp.ne.s32.totalorder %s27, %s30
      %p39 = scmp.eq.s32.totalorder %s22, 1
      %p40 = por %p38, %p39
      %p41 = scmp.ne.s32.totalorder %s30, %s31
      %p42 = scmp.eq.s32.totalorder %s22, 0
      %p43 = por %p41, %p42
      %p44 = scmp.ne.s32.totalorder %s30, %s31
      %p45 = scmp.eq.s32.totalorder %s23, 1
      %p46 = por %p44, %p45
      %p48 = scmp.ne.s32.totalorder %s31, %s47
      %p49 = scmp.eq.s32.totalorder %s23, 0
      %p50 = por %p48, %p49
      %s52 = sadd.s32 %s51, 1
      %p55 = scmp.eq.s32.totalorder %s17, 1
      %p56 = scmp.ne.s32.totalorder %s51, %s53
      %p57 = scmp.eq.s32.totalorder %s17, 0
      %p58 = por %p56, %p57
      %p59 = scmp.ne.s32.totalorder %s51, %s53
      %p60 = scmp.eq.s32.totalorder %s22, 1
      %p61 = por %p59, %p60
      %p62 = scmp.ne.s32.totalorder %s53, %s54
      %p63 = scmp.eq.s32.totalorder %s22, 0
      %p64 = por %p62, %p63
      %p65 = scmp.ne.s32.totalorder %s53, %s54
      %p66 = scmp.eq.s32.totalorder %s23, 1
      %p67 = por %p65, %p66
      %p69 = scmp.ne.s32.totalorder %s54, %s68
      %p70 = scmp.eq.s32.totalorder %s23, 0
      %p71 = por %p69, %p70
      %s73 = sadd.s32 %s72, 1
      %p76 = scmp.eq.s32.totalorder %s17, 1
      %p77 = scmp.ne.s32.totalorder %s72, %s74
      %p78 = scmp.eq.s32.totalorder %s17, 0
      %p79 = por %p77, %p78
      %p80 = scmp.ne.s32.totalorder %s72, %s74
      %p81 = scmp.eq.s32.totalorder %s22, 1
      %p82 = por %p80, %p81
      %p83 = scmp.ne.s32.totalorder %s74, %s75
      %p84 = scmp.eq.s32.totalorder %s22, 0
      %p85 = por %p83, %p84
      %p86 = scmp.ne.s32.totalorder %s74, %s75
      %p87 = scmp.eq.s32.totalorder %s23, 1
      %p88 = por %p86, %p87
      %p90 = scmp.ne.s32.totalorder %s75, %s89
      %p91 = scmp.eq.s32.totalorder %s23, 0
      %p92 = por %p90, %p91
      %s94 = sadd.s32 %s93, 1
      %p97 = scmp.eq.s32.totalorder %s17, 1
      %p98 = scmp.ne.s32.totalorder %s93, %s95
      %p99 = scmp.eq.s32.totalorder %s17, 0
      %p100 = por %p98, %p99
      %p101 = scmp.ne.s32.totalorder %s93, %s95
      %p102 = scmp.eq.s32.totalorder %s22, 1
      %p103 = por %p101, %p102
      %p104 = scmp.ne.s32.totalorder %s95, %s96
      %p105 = scmp.eq.s32.totalorder %s22, 0
      %p106 = por %p104, %p105
      %p107 = scmp.ne.s32.totalorder %s95, %s96
      %p108 = scmp.eq.s32.totalorder %s23, 1
      %p109 = por %p107, %p108
      %p111 = scmp.ne.s32.totalorder %s96, %s110
      %p112 = scmp.eq.s32.totalorder %s23, 0
      %p113 = por %p111, %p112
      %s115 = sadd.s32 %s114, 1
      %p118 = scmp.eq.s32.totalorder %s17, 1
      %p119 = scmp.ne.s32.totalorder %s114, %s116
      %p120 = scmp.eq.s32.totalorder %s17, 0
      %p121 = por %p119, %p120
      %p122 = scmp.ne.s32.totalorder %s114, %s116
      %p123 = scmp.eq.s32.totalorder %s22, 1
      %p124 = por %p122, %p123
      %p125 = scmp.ne.s32.totalorder %s116, %s117
      %p126 = scmp.eq.s32.totalorder %s22, 0
      %p127 = por %p125, %p126
      %p128 = scmp.ne.s32.totalorder %s116, %s117
      %p129 = scmp.eq.s32.totalorder %s23, 1
      %p130 = por %p128, %p129
      %p132 = scmp.ne.s32.totalorder %s117, %s131
      %p133 = scmp.eq.s32.totalorder %s23, 0
      %p134 = por %p132, %p133
      %s136 = sadd.s32 %s135, 1
      %p139 = scmp.eq.s32.totalorder %s17, 1
      %p140 = scmp.ne.s32.totalorder %s135, %s137
      %p141 = scmp.eq.s32.totalorder %s17, 0
      %p142 = por %p140, %p141
      %p143 = scmp.ne.s32.totalorder %s135, %s137
      %p144 = scmp.eq.s32.totalorder %s22, 1
      %p145 = por %p143, %p144
      %p146 = scmp.ne.s32.totalorder %s137, %s138
      %p147 = scmp.eq.s32.totalorder %s22, 0
      %p148 = por %p146, %p147
      %p149 = scmp.ne.s32.totalorder %s137, %s138
      %p150 = scmp.eq.s32.totalorder %s23, 1
      %p151 = por %p149, %p150
      %p153 = scmp.ne.s32.totalorder %s138, %s152
      %p154 = scmp.eq.s32.totalorder %s23, 0
      %p155 = por %p153, %p154
      %s157 = sadd.s32 %s156, 1
      %p160 = scmp.eq.s32.totalorder %s17, 1
      %p161 = scmp.ne.s32.totalorder %s156, %s158
      %p162 = scmp.eq.s32.totalorder %s17, 0
      %p163 = por %p161, %p162
      %p164 = scmp.ne.s32.totalorder %s156, %s158
      %p165 = scmp.eq.s32.totalorder %s22, 1
      %p166 = por %p164, %p165
      %p167 = scmp.ne.s32.totalorder %s158, %s159
      %p168 = scmp.eq.s32.totalorder %s22, 0
      %p169 = por %p167, %p168
      %p170 = scmp.ne.s32.totalorder %s158, %s159
      %p171 = scmp.eq.s32.totalorder %s23, 1
      %p172 = por %p170, %p171
      %p174 = scmp.ne.s32.totalorder %s159, %s173
      %p175 = scmp.eq.s32.totalorder %s23, 0
      %p176 = por %p174, %p175
      %s178 = sadd.s32 %s177, 1
      %p181 = scmp.eq.s32.totalorder %s17, 1
      %p182 = scmp.ne.s32.totalorder %s177, %s179
      %p183 = scmp.eq.s32.totalorder %s17, 0
      %p184 = por %p182, %p183
      %p185 = scmp.ne.s32.totalorder %s177, %s179
      %p186 = scmp.eq.s32.totalorder %s22, 1
      %p187 = por %p185, %p186
      %p188 = scmp.ne.s32.totalorder %s179, %s180
      %p189 = scmp.eq.s32.totalorder %s22, 0
      %p190 = por %p188, %p189
      %p191 = scmp.ne.s32.totalorder %s179, %s180
      %p192 = scmp.eq.s32.totalorder %s23, 1
      %p193 = por %p191, %p192
      %p195 = scmp.ne.s32.totalorder %s180, %s194
      %p196 = scmp.eq.s32.totalorder %s23, 0
      %p197 = por %p195, %p196
      %s198 = ssub.s32 %s17, %s24
      %p199 = scmp.eq.s32.totalorder %s198, 0
      %s201 = sadd.s32 %s200, 1
      %s202 = scalar_select %p199, %s200, %s201
      %p205 = pneg %p199
      %p206 = scmp.eq.s32.totalorder %s17, 1
      %p207 = por %p205, %p206
      %p208 = scmp.ne.s32.totalorder %s200, %s203
      %p209 = scmp.eq.s32.totalorder %s17, 0
      %p210 = por %p208, %p209
      %p211 = scmp.ne.s32.totalorder %s200, %s203
      %p212 = scmp.eq.s32.totalorder %s22, 1
      %p213 = por %p211, %p212
      %p214 = scmp.ne.s32.totalorder %s203, %s204
      %p215 = scmp.eq.s32.totalorder %s22, 0
      %p216 = por %p214, %p215
      %p217 = scmp.ne.s32.totalorder %s203, %s204
      %p218 = scmp.eq.s32.totalorder %s23, 1
      %p219 = por %p217, %p218
      %p221 = scmp.ne.s32.totalorder %s204, %s220
      %p222 = scmp.eq.s32.totalorder %s23, 0
      %p223 = por %p221, %p222
      %p224 = scmp.le.s32.totalorder 1, %s17
      %p225 = scmp.lt.s32.totalorder %s17, 3
      %p226 = pnand %p224, %p225
      %p227 = pneg %p226
      // Predicated region
      $region9: #{tpu_custom_call.1} parent=5 // pred_check
        _
      $region10: #{tpu_custom_call.1} parent=5 // pred_check_branch
        %229 = sbr.rel (%p226) target = $region12
      $region11: #{tpu_custom_call.1} parent=5 // pred_region
        %s230 = ssub.s32 %s17, 1
        // Predicated region
        $region13: #{tpu_custom_call.1} parent=11 // pred_check
          %p231 = pneg %p64
        $region14: #{tpu_custom_call.1} parent=11 // pred_check_branch
          %233 = sbr.rel (%p231) target = $region16
        $region15: #{tpu_custom_call.1} parent=11 // pred_region
          _
        $region16: #{tpu_custom_call.1} parent=11 // pred_fallthru
          _
        // Predicated region
        $region17: #{tpu_custom_call.1} parent=11 // pred_check
          %p234 = pneg %p85
        $region18: #{tpu_custom_call.1} parent=11 // pred_check_branch
          %236 = sbr.rel (%p234) target = $region20
        $region19: #{tpu_custom_call.1} parent=11 // pred_region
          _
        $region20: #{tpu_custom_call.1} parent=11 // pred_fallthru
          _
        // Predicated region
        $region21: #{tpu_custom_call.1} parent=11 // pred_check
          %p237 = pneg %p106
        $region22: #{tpu_custom_call.1} parent=11 // pred_check_branch
          %239 = sbr.rel (%p237) target = $region24
        $region23: #{tpu_custom_call.1} parent=11 // pred_region
          _
        $region24: #{tpu_custom_call.1} parent=11 // pred_fallthru
          _
        // Predicated region
        $region25: #{tpu_custom_call.1} parent=11 // pred_check
          %p240 = pneg %p127
        $region26: #{tpu_custom_call.1} parent=11 // pred_check_branch
          %242 = sbr.rel (%p240) target = $region28
        $region27: #{tpu_custom_call.1} parent=11 // pred_region
          _
        $region28: #{tpu_custom_call.1} parent=11 // pred_fallthru
          _
        // Predicated region
        $region29: #{tpu_custom_call.1} parent=11 // pred_check
          %p243 = pneg %p148
        $region30: #{tpu_custom_call.1} parent=11 // pred_check_branch
          %245 = sbr.rel (%p243) target = $region32
        $region31: #{tpu_custom_call.1} parent=11 // pred_region
          _
        $region32: #{tpu_custom_call.1} parent=11 // pred_fallthru
          _
        // Predicated region
        $region33: #{tpu_custom_call.1} parent=11 // pred_check
          %p246 = pneg %p169
        $region34: #{tpu_custom_call.1} parent=11 // pred_check_branch
          %248 = sbr.rel (%p246) target = $region36
        $region35: #{tpu_custom_call.1} parent=11 // pred_region
          _
        $region36: #{tpu_custom_call.1} parent=11 // pred_fallthru
          _
        // Predicated region
        $region37: #{tpu_custom_call.1} parent=11 // pred_check
          %p249 = pneg %p190
        $region38: #{tpu_custom_call.1} parent=11 // pred_check_branch
          %251 = sbr.rel (%p249) target = $region40
        $region39: #{tpu_custom_call.1} parent=11 // pred_region
          _
        $region40: #{tpu_custom_call.1} parent=11 // pred_fallthru
          _
      $region12: #{tpu_custom_call.1} parent=5 // pred_fallthru
        _
      %p252 = scmp.lt.s32.totalorder %s17, 2
      // Predicated region
      $region41: #{tpu_custom_call.1} parent=5 // pred_check
        %p253 = pneg %p252
      $region42: #{tpu_custom_call.1} parent=5 // pred_check_branch
        %255 = sbr.rel (%p253) target = $region44
      $region43: #{tpu_custom_call.1} parent=5 // pred_region
        // Predicated region
        $region45: #{tpu_custom_call.1} parent=43 // pred_check
          %p256 = pneg %p37
        $region46: #{tpu_custom_call.1} parent=43 // pred_check_branch
          %258 = sbr.rel (%p256) target = $region48
        $region47: #{tpu_custom_call.1} parent=43 // pred_region
          %p259 = scmp.lt.s32.totalorder %s17, 1
          %s260 = scalar_select %p259, %s17, 1
          %s261 = smul.addr %s260, 2
          %s262 = smul.addr %s261, 4
          %s263 = scalar_lea.vmem %s0, %s262
        $region48: #{tpu_custom_call.1} parent=43 // pred_fallthru
          _
      $region44: #{tpu_custom_call.1} parent=5 // pred_fallthru
        _
      %p264 = scmp.le.s32.totalorder 1, %s17
      %p265 = scmp.lt.s32.totalorder %s17, 3
      %p266 = pnand %p264, %p265
      %p267 = pneg %p266
      // Predicated region
      $region49: #{tpu_custom_call.1} parent=5 // pred_check
        _
      $region50: #{tpu_custom_call.1} parent=5 // pred_check_branch
        %269 = sbr.rel (%p266) target = $region52
      $region51: #{tpu_custom_call.1} parent=5 // pred_region
        %s270 = ssub.s32 %s17, 1
        %p271 = scmp.lt.s32.totalorder %s22, 1
        %s272 = scalar_select %p271, %s22, 1
        %s273 = smul.addr %s272, 2
        %s274 = smul.addr %s273, 4
        %s275 = scalar_lea.vmem %s0, %s274
        %p276 = pneg %p43
        %p277 = pneg %p40
        %p278 = pneg %p64
        %p279 = pneg %p61
        %p280 = pneg %p85
        %p281 = pneg %p82
        %p282 = pneg %p106
        %p283 = pneg %p103
        %p284 = pneg %p127
        %p285 = pneg %p124
        %p286 = pneg %p148
        %p287 = pneg %p145
        %p288 = pneg %p169
        %p289 = pneg %p166
        %p290 = pneg %p190
        %p291 = pneg %p187
        %p292 = pneg %p216
        %p293 = pneg %p213
        %s294 = sand.u32 %s203, 1
        %s295 = scalar_lea.sflag [#allocation3], %s294
        %s296 = sand.u32 %s203, 1
        %s297 = smul.addr %s296, 16
        %s298 = scalar_lea.vmem [#allocation2], %s297
        %p299 = scmp.lt.s32.totalorder %s22, 1
        %s300 = scalar_select %p299, %s22, 1
        %s301 = smul.addr %s300, 2
        %s302 = smul.addr %s301, 4
        %s303 = scalar_lea.vmem %s0, %s302
        %v305 = vld [vmem:[%s303] sm:$0xff]
        %v306 = vld [vmem:[%s1] sm:$0xf]
        %v307 = vld [vmem:[%s1 + $0x4] sm:$0xf]
        %v308 = vld [vmem:[%s2] sm:$0xff]
        %v309 = vld [vmem:[%s2 + $0x8] sm:$0xff]
        %311 = vset.pattern.permute.xlu0 0
        %312 = vperm.xlu0 %311, %v308
        %v313 = vpop.permute.xlu0 %312
        %316 = vset.pattern.permute.xlu0 0
        %317 = vperm.xlu0 %316, %v309
        %v318 = vpop.permute.xlu0 %317
        %v322 = vunpack.c.l.b16 %v306
        %v323 = vunpack.c.l.b16 %v307
        %v324 = vpack.c.b16 %v323, %v322
        %v326 = vunpack.c.l.b16 %v305
        %v327 = vunpack.c.h.b16 %v305
        %v328 = vpack.c.b16 %v326, %v326
        %v329 = vpack.c.b16 %v327, %v327
        %vm330 = vcmask 64512
        %v332 = vsel %vm330, %v324, 0
        %vm334 = vcmask 1043456
        %v336 = vsel %vm334, %v328, 0
        %v339 = vsel %vm334, %v329, 0
        %341 = vmatprep.subr.bf16.mxu0 %v339
        %342 = vmatpush1.bf16.msra.mxu0 %v336
        %343 = vmatprep.subr.bf16.mxu0 0
        %344 = vmatpush1.bf16.msra.mxu0 0
        %345 = vmatprep.subr.bf16.mxu0 0
        %346 = vmatpush1.bf16.msra.mxu0 0
        %347 = vmatprep.subr.bf16.mxu0 0
        %348 = vmatpush1.bf16.msra.mxu0 0
        %349 = vmatprep.subr.bf16.mxu0 0
        %350 = vmatpush1.bf16.msra.mxu0 0
        %351 = vmatprep.subr.bf16.mxu0 0
        %352 = vmatpush1.bf16.msra.mxu0 0
        %353 = vmatprep.subr.bf16.mxu0 0
        %354 = vmatpush1.bf16.msra.mxu0 0
        %355 = vmatprep.subr.bf16.mxu0 0
        %356 = vmatpush1.bf16.msra.mxu0 0
        %357 = vmatprep.subr.bf16.mxu0 0
        %358 = vmatpush1.bf16.msra.mxu0 0
        %359 = vmatprep.subr.bf16.mxu0 0
        %360 = vmatpush1.bf16.msra.mxu0 0
        %361 = vmatprep.subr.bf16.mxu0 0
        %362 = vmatpush1.bf16.msra.mxu0 0
        %363 = vmatprep.subr.bf16.mxu0 0
        %364 = vmatpush1.bf16.msra.mxu0 0
        %365 = vmatprep.subr.bf16.mxu0 0
        %366 = vmatpush1.bf16.msra.mxu0 0
        %367 = vmatprep.subr.bf16.mxu0 0
        %368 = vmatpush1.bf16.msra.mxu0 0
        %369 = vmatprep.subr.bf16.mxu0 0
        %370 = vmatpush1.bf16.msra.mxu0 0
        %371 = vmatprep.subr.bf16.mxu0 0
        %372 = vmatpush1.bf16.msra.mxu0 0
        %373 = vmatprep.mubr.bf16.mxu0 0
        %374 = vmatmul.mubr.bf16.gmra.mrb[0].mxu0 %v332
        %v375 = vpop.f32.mrb[0].mxu0
        %v376 = vadd.f32 %v313, %v375
        %v377 = vpop.f32.mrb[0].mxu0
        %v378 = vadd.f32 %v313, %v377
        %v379 = vpop.f32.mrb[0].mxu0
        %v380 = vadd.f32 %v318, %v379
        %v381 = vpop.f32.mrb[0].mxu0
        %v382 = vadd.f32 %v318, %v381
        %383 = vdwg.mxu0
        %v384 = vmax.f32 %v376, 0.0
        %v385 = vmax.f32 %v378, 0.0
        %v386 = vmax.f32 %v380, 0.0
        %v387 = vmax.f32 %v382, 0.0
        %v388 = vmin.f32 %v384, 6.0
        %v389 = vmin.f32 %v385, 6.0
        %v390 = vmin.f32 %v386, 6.0
        %v391 = vmin.f32 %v387, 6.0
        %v392 = vld [vmem:[%s3] sm:$0xff]
        %v393 = vld [vmem:[%s3 + $0x8] sm:$0xff]
        %395 = vset.pattern.permute.xlu0 4
        %396 = vperm.xlu0 %395, %v392
        %v397 = vpop.permute.xlu0 %396
        %400 = vset.pattern.permute.xlu0 4
        %401 = vperm.xlu0 %400, %v393
        %v402 = vpop.permute.xlu0 %401
        %v404 = vmul.f32 %v388, %v397
        %v405 = vmul.f32 %v389, %v397
        %v406 = vmul.f32 %v390, %v402
        %v407 = vmul.f32 %v391, %v402
        %408 = vrot.lane.b32.xlu0 %v388, 17
        %v409 = vpop.permute.xlu0 %408
        %410 = vrot.lane.b32.xlu0 %v390, 17
        %v411 = vpop.permute.xlu0 %410
        %412 = vrot.lane.b32.xlu0 %v389, 17
        %v413 = vpop.permute.xlu0 %412
        %414 = vrot.lane.b32.xlu0 %v391, 17
        %v415 = vpop.permute.xlu0 %414
        %v416 = vlaneseq
        %v417 = vand.u32 %v416, 127
        %vm418 = vcmp.lt.s32.totalorder %v417, 17
        %v419 = vsel %vm418, %v409, %v413
        %v420 = vsel %vm418, %v411, %v415
        %v421 = vsel %vm418, %v413, %v409
        %v422 = vsel %vm418, %v415, %v411
        %v423 = vld [vmem:[%s7] ss:$8 sm:$0x3]
        %v425 = vlaneseq
        %v426 = vshrl.u32 %v425, 7
        %v427 = vsub.s32 0, %v426
        %v428 = vrot.slane %v423, %v427
        %v429 = vlaneseq
        %v430 = vshrl.u32 %v429, 7
        %v431 = vsub.s32 1, %v430
        %v432 = vrot.slane %v423, %v431
        %v435 = vmul.f32 %v421, %v428
        %v436 = vmul.f32 %v419, %v432
        %v437 = vmul.f32 %v422, %v428
        %v438 = vmul.f32 %v420, %v432
        %439 = vset.pattern.permute.xlu0 0
        %440 = vperm.xlu0 %439, %v392
        %v441 = vpop.permute.xlu0 %440
        %443 = vset.pattern.permute.xlu0 0
        %444 = vperm.xlu0 %443, %v393
        %v445 = vpop.permute.xlu0 %444
        %v447 = vmul.f32 %v435, %v441
        %v448 = vmul.f32 %v436, %v441
        %v449 = vmul.f32 %v437, %v445
        %v450 = vmul.f32 %v438, %v445
        %v451 = vadd.f32 %v404, %v447
        %v452 = vadd.f32 %v405, %v448
        %v453 = vadd.f32 %v406, %v449
        %v454 = vadd.f32 %v407, %v450
        %455 = vrot.lane.b32.xlu0 %v388, 16
        %v456 = vpop.permute.xlu0 %455
        %457 = vrot.lane.b32.xlu0 %v390, 16
        %v458 = vpop.permute.xlu0 %457
        %459 = vrot.lane.b32.xlu0 %v389, 16
        %v460 = vpop.permute.xlu0 %459
        %461 = vrot.lane.b32.xlu0 %v391, 16
        %v462 = vpop.permute.xlu0 %461
        %vm463 = vcmp.lt.s32.totalorder %v417, 16
        %v464 = vsel %vm463, %v456, %v460
        %v465 = vsel %vm463, %v458, %v462
        %v466 = vsel %vm463, %v460, %v456
        %v467 = vsel %vm463, %v462, %v458
        %s468 = scalar_lea.vmem %s7, 1
        %v469 = vld [vmem:[%s468] ss:$8 sm:$0x3]
        %v471 = vlaneseq
        %v472 = vshrl.u32 %v471, 7
        %v473 = vsub.s32 0, %v472
        %v474 = vrot.slane %v469, %v473
        %v475 = vlaneseq
        %v476 = vshrl.u32 %v475, 7
        %v477 = vsub.s32 1, %v476
        %v478 = vrot.slane %v469, %v477
        %v481 = vmul.f32 %v466, %v474
        %v482 = vmul.f32 %v464, %v478
        %v483 = vmul.f32 %v467, %v474
        %v484 = vmul.f32 %v465, %v478
        %485 = vset.pattern.permute.xlu0 1
        %486 = vperm.xlu0 %485, %v392
        %v487 = vpop.permute.xlu0 %486
        %489 = vset.pattern.permute.xlu0 1
        %490 = vperm.xlu0 %489, %v393
        %v491 = vpop.permute.xlu0 %490
        %v493 = vmul.f32 %v481, %v487
        %v494 = vmul.f32 %v482, %v487
        %v495 = vmul.f32 %v483, %v491
        %v496 = vmul.f32 %v484, %v491
        %v497 = vadd.f32 %v451, %v493
        %v498 = vadd.f32 %v452, %v494
        %v499 = vadd.f32 %v453, %v495
        %v500 = vadd.f32 %v454, %v496
        %501 = vrot.lane.b32.xlu0 %v388, 15
        %v502 = vpop.permute.xlu0 %501
        %503 = vrot.lane.b32.xlu0 %v390, 15
        %v504 = vpop.permute.xlu0 %503
        %505 = vrot.lane.b32.xlu0 %v389, 15
        %v506 = vpop.permute.xlu0 %505
        %507 = vrot.lane.b32.xlu0 %v391, 15
        %v508 = vpop.permute.xlu0 %507
        %vm509 = vcmp.lt.s32.totalorder %v417, 15
        %v510 = vsel %vm509, %v502, %v506
        %v511 = vsel %vm509, %v504, %v508
        %v512 = vsel %vm509, %v506, %v502
        %v513 = vsel %vm509, %v508, %v504
        %s514 = scalar_lea.vmem %s7, 2
        %v515 = vld [vmem:[%s514] ss:$8 sm:$0x3]
        %v517 = vlaneseq
        %v518 = vshrl.u32 %v517, 7
        %v519 = vsub.s32 0, %v518
        %v520 = vrot.slane %v515, %v519
        %v521 = vlaneseq
        %v522 = vshrl.u32 %v521, 7
        %v523 = vsub.s32 1, %v522
        %v524 = vrot.slane %v515, %v523
        %v527 = vmul.f32 %v512, %v520
        %v528 = vmul.f32 %v510, %v524
        %v529 = vmul.f32 %v513, %v520
        %v530 = vmul.f32 %v511, %v524
        %531 = vset.pattern.permute.xlu0 2
        %532 = vperm.xlu0 %531, %v392
        %v533 = vpop.permute.xlu0 %532
        %535 = vset.pattern.permute.xlu0 2
        %536 = vperm.xlu0 %535, %v393
        %v537 = vpop.permute.xlu0 %536
        %v539 = vmul.f32 %v527, %v533
        %v540 = vmul.f32 %v528, %v533
        %v541 = vmul.f32 %v529, %v537
        %v542 = vmul.f32 %v530, %v537
        %v543 = vadd.f32 %v497, %v539
        %v544 = vadd.f32 %v498, %v540
        %v545 = vadd.f32 %v499, %v541
        %v546 = vadd.f32 %v500, %v542
        %547 = vrot.lane.b32.xlu0 %v388, 1
        %v548 = vpop.permute.xlu0 %547
        %549 = vrot.lane.b32.xlu0 %v390, 1
        %v550 = vpop.permute.xlu0 %549
        %551 = vrot.lane.b32.xlu0 %v389, 1
        %v552 = vpop.permute.xlu0 %551
        %553 = vrot.lane.b32.xlu0 %v391, 1
        %v554 = vpop.permute.xlu0 %553
        %vm555 = vcmp.lt.s32.totalorder %v417, 1
        %v556 = vsel %vm555, %v548, %v552
        %v557 = vsel %vm555, %v550, %v554
        %v558 = vsel %vm555, %v552, %v548
        %v559 = vsel %vm555, %v554, %v550
        %s560 = scalar_lea.vmem %s7, 3
        %v561 = vld [vmem:[%s560] ss:$8 sm:$0x3]
        %v563 = vlaneseq
        %v564 = vshrl.u32 %v563, 7
        %v565 = vsub.s32 0, %v564
        %v566 = vrot.slane %v561, %v565
        %v567 = vlaneseq
        %v568 = vshrl.u32 %v567, 7
        %v569 = vsub.s32 1, %v568
        %v570 = vrot.slane %v561, %v569
        %v573 = vmul.f32 %v558, %v566
        %v574 = vmul.f32 %v556, %v570
        %v575 = vmul.f32 %v559, %v566
        %v576 = vmul.f32 %v557, %v570
        %577 = vset.pattern.permute.xlu0 3
        %578 = vperm.xlu0 %577, %v392
        %v579 = vpop.permute.xlu0 %578
        %581 = vset.pattern.permute.xlu0 3
        %582 = vperm.xlu0 %581, %v393
        %v583 = vpop.permute.xlu0 %582
        %v585 = vmul.f32 %v573, %v579
        %v586 = vmul.f32 %v574, %v579
        %v587 = vmul.f32 %v575, %v583
        %v588 = vmul.f32 %v576, %v583
        %v589 = vadd.f32 %v543, %v585
        %v590 = vadd.f32 %v544, %v586
        %v591 = vadd.f32 %v545, %v587
        %v592 = vadd.f32 %v546, %v588
        %593 = vrot.lane.b32.xlu0 %v388, 127
        %v594 = vpop.permute.xlu0 %593
        %595 = vrot.lane.b32.xlu0 %v390, 127
        %v596 = vpop.permute.xlu0 %595
        %597 = vrot.lane.b32.xlu0 %v389, 127
        %v598 = vpop.permute.xlu0 %597
        %599 = vrot.lane.b32.xlu0 %v391, 127
        %v600 = vpop.permute.xlu0 %599
        %vm601 = vcmp.lt.s32.totalorder %v417, 127
        %v602 = vsel %vm601, %v594, %v598
        %v603 = vsel %vm601, %v596, %v600
        %v604 = vsel %vm601, %v598, %v594
        %v605 = vsel %vm601, %v600, %v596
        %s606 = scalar_lea.vmem %s7, 5
        %v607 = vld [vmem:[%s606] ss:$8 sm:$0x3]
        %v609 = vlaneseq
        %v610 = vshrl.u32 %v609, 7
        %v611 = vsub.s32 0, %v610
        %v612 = vrot.slane %v607, %v611
        %v613 = vlaneseq
        %v614 = vshrl.u32 %v613, 7
        %v615 = vsub.s32 1, %v614
        %v616 = vrot.slane %v607, %v615
        %v619 = vmul.f32 %v602, %v612
        %v620 = vmul.f32 %v604, %v616
        %v621 = vmul.f32 %v603, %v612
        %v622 = vmul.f32 %v605, %v616
        %623 = vset.pattern.permute.xlu0 5
        %624 = vperm.xlu0 %623, %v392
        %v625 = vpop.permute.xlu0 %624
        %627 = vset.pattern.permute.xlu0 5
        %628 = vperm.xlu0 %627, %v393
        %v629 = vpop.permute.xlu0 %628
        %v631 = vmul.f32 %v619, %v625
        %v632 = vmul.f32 %v620, %v625
        %v633 = vmul.f32 %v621, %v629
        %v634 = vmul.f32 %v622, %v629
        %v635 = vadd.f32 %v589, %v631
        %v636 = vadd.f32 %v590, %v632
        %v637 = vadd.f32 %v591, %v633
        %v638 = vadd.f32 %v592, %v634
        %639 = vrot.lane.b32.xlu0 %v388, 113
        %v640 = vpop.permute.xlu0 %639
        %641 = vrot.lane.b32.xlu0 %v390, 113
        %v642 = vpop.permute.xlu0 %641
        %643 = vrot.lane.b32.xlu0 %v389, 113
        %v644 = vpop.permute.xlu0 %643
        %645 = vrot.lane.b32.xlu0 %v391, 113
        %v646 = vpop.permute.xlu0 %645
        %vm647 = vcmp.lt.s32.totalorder %v417, 113
        %v648 = vsel %vm647, %v640, %v644
        %v649 = vsel %vm647, %v642, %v646
        %v650 = vsel %vm647, %v644, %v640
        %v651 = vsel %vm647, %v646, %v642
        %s652 = scalar_lea.vmem %s7, 6
        %v653 = vld [vmem:[%s652] ss:$8 sm:$0x3]
        %v655 = vlaneseq
        %v656 = vshrl.u32 %v655, 7
        %v657 = vsub.s32 0, %v656
        %v658 = vrot.slane %v653, %v657
        %v659 = vlaneseq
        %v660 = vshrl.u32 %v659, 7
        %v661 = vsub.s32 1, %v660
        %v662 = vrot.slane %v653, %v661
        %v665 = vmul.f32 %v648, %v658
        %v666 = vmul.f32 %v650, %v662
        %v667 = vmul.f32 %v649, %v658
        %v668 = vmul.f32 %v651, %v662
        %669 = vset.pattern.permute.xlu0 6
        %670 = vperm.xlu0 %669, %v392
        %v671 = vpop.permute.xlu0 %670
        %673 = vset.pattern.permute.xlu0 6
        %674 = vperm.xlu0 %673, %v393
        %v675 = vpop.permute.xlu0 %674
        %v677 = vmul.f32 %v665, %v671
        %v678 = vmul.f32 %v666, %v671
        %v679 = vmul.f32 %v667, %v675
        %v680 = vmul.f32 %v668, %v675
        %v681 = vadd.f32 %v635, %v677
        %v682 = vadd.f32 %v636, %v678
        %v683 = vadd.f32 %v637, %v679
        %v684 = vadd.f32 %v638, %v680
        %685 = vrot.lane.b32.xlu0 %v388, 112
        %v686 = vpop.permute.xlu0 %685
        %687 = vrot.lane.b32.xlu0 %v390, 112
        %v688 = vpop.permute.xlu0 %687
        %689 = vrot.lane.b32.xlu0 %v389, 112
        %v690 = vpop.permute.xlu0 %689
        %691 = vrot.lane.b32.xlu0 %v391, 112
        %v692 = vpop.permute.xlu0 %691
        %vm693 = vcmp.lt.s32.totalorder %v417, 112
        %v694 = vsel %vm693, %v686, %v690
        %v695 = vsel %vm693, %v688, %v692
        %v696 = vsel %vm693, %v690, %v686
        %v697 = vsel %vm693, %v692, %v688
        %s698 = scalar_lea.vmem %s7, 7
        %v699 = vld [vmem:[%s698] ss:$8 sm:$0x3]
        %v701 = vlaneseq
        %v702 = vshrl.u32 %v701, 7
        %v703 = vsub.s32 0, %v702
        %v704 = vrot.slane %v699, %v703
        %v705 = vlaneseq
        %v706 = vshrl.u32 %v705, 7
        %v707 = vsub.s32 1, %v706
        %v708 = vrot.slane %v699, %v707
        %v711 = vmul.f32 %v694, %v704
        %v712 = vmul.f32 %v696, %v708
        %v713 = vmul.f32 %v695, %v704
        %v714 = vmul.f32 %v697, %v708
        %715 = vset.pattern.permute.xlu0 7
        %716 = vperm.xlu0 %715, %v392
        %v717 = vpop.permute.xlu0 %716
        %719 = vset.pattern.permute.xlu0 7
        %720 = vperm.xlu0 %719, %v393
        %v721 = vpop.permute.xlu0 %720
        %v723 = vmul.f32 %v711, %v717
        %v724 = vmul.f32 %v712, %v717
        %v725 = vmul.f32 %v713, %v721
        %v726 = vmul.f32 %v714, %v721
        %v727 = vadd.f32 %v681, %v723
        %v728 = vadd.f32 %v682, %v724
        %v729 = vadd.f32 %v683, %v725
        %v730 = vadd.f32 %v684, %v726
        %731 = vrot.lane.b32.xlu0 %v388, 111
        %v732 = vpop.permute.xlu0 %731
        %733 = vrot.lane.b32.xlu0 %v390, 111
        %v734 = vpop.permute.xlu0 %733
        %735 = vrot.lane.b32.xlu0 %v389, 111
        %v736 = vpop.permute.xlu0 %735
        %737 = vrot.lane.b32.xlu0 %v391, 111
        %v738 = vpop.permute.xlu0 %737
        %vm739 = vcmp.lt.s32.totalorder %v417, 111
        %v740 = vsel %vm739, %v732, %v736
        %v741 = vsel %vm739, %v734, %v738
        %v742 = vsel %vm739, %v736, %v732
        %v743 = vsel %vm739, %v738, %v734
        %s744 = scalar_lea.vmem %s7, 16
        %v745 = vld [vmem:[%s744] ss:$8 sm:$0x3]
        %v747 = vlaneseq
        %v748 = vshrl.u32 %v747, 7
        %v749 = vsub.s32 0, %v748
        %v750 = vrot.slane %v745, %v749
        %v751 = vlaneseq
        %v752 = vshrl.u32 %v751, 7
        %v753 = vsub.s32 1, %v752
        %v754 = vrot.slane %v745, %v753
        %v757 = vmul.f32 %v740, %v750
        %v758 = vmul.f32 %v742, %v754
        %v759 = vmul.f32 %v741, %v750
        %v760 = vmul.f32 %v743, %v754
        %761 = vset.pattern.permute.xlu0 8
        %762 = vperm.xlu0 %761, %v392
        %v763 = vpop.permute.xlu0 %762
        %765 = vset.pattern.permute.xlu0 8
        %766 = vperm.xlu0 %765, %v393
        %v767 = vpop.permute.xlu0 %766
        %v769 = vmul.f32 %v757, %v763
        %v770 = vmul.f32 %v758, %v763
        %v771 = vmul.f32 %v759, %v767
        %v772 = vmul.f32 %v760, %v767
        %v773 = vadd.f32 %v727, %v769
        %v774 = vadd.f32 %v728, %v770
        %v775 = vadd.f32 %v729, %v771
        %v776 = vadd.f32 %v730, %v772
        %v777 = vld [vmem:[%s4] sm:$0xff]
        %v778 = vld [vmem:[%s4 + $0x8] sm:$0xff]
        %780 = vset.pattern.permute.xlu0 0
        %781 = vperm.xlu0 %780, %v777
        %v782 = vpop.permute.xlu0 %781
        %785 = vset.pattern.permute.xlu0 0
        %786 = vperm.xlu0 %785, %v778
        %v787 = vpop.permute.xlu0 %786
        %v789 = vadd.f32 %v773, %v782
        %v790 = vadd.f32 %v774, %v782
        %v791 = vadd.f32 %v775, %v787
        %v792 = vadd.f32 %v776, %v787
        %v793 = vmax.f32 %v789, 0.0
        %v794 = vmax.f32 %v790, 0.0
        %v795 = vmax.f32 %v791, 0.0
        %v796 = vmax.f32 %v792, 0.0
        %v797 = vmin.f32 %v793, 6.0
        %v798 = vmin.f32 %v794, 6.0
        %v799 = vmin.f32 %v795, 6.0
        %v800 = vmin.f32 %v796, 6.0
        %v801 = vld [vmem:[%s5] sm:$0xf]
        %v802 = vpack.c.bf16 %v799, %v797
        %v803 = vpack.c.bf16 %v800, %v798
        %v804 = vld [vmem:[%s6] sm:$0xff]
        %806 = vset.pattern.permute.xlu0 0
        %807 = vperm.xlu0 %806, %v804
        %v808 = vpop.permute.xlu0 %807
        %vm810 = vcmask 130048
        %v812 = vsel %vm810, %v801, 0
        %814 = vmatprep.subr.bf16.mxu0 %v803
        %815 = vmatpush1.bf16.msra.mxu0 %v802
        %816 = vmatprep.subr.bf16.mxu0 0
        %817 = vmatpush1.bf16.msra.mxu0 0
        %818 = vmatprep.subr.bf16.mxu0 0
        %819 = vmatpush1.bf16.msra.mxu0 0
        %820 = vmatprep.subr.bf16.mxu0 0
        %821 = vmatpush1.bf16.msra.mxu0 0
        %822 = vmatprep.subr.bf16.mxu0 0
        %823 = vmatpush1.bf16.msra.mxu0 0
        %824 = vmatprep.subr.bf16.mxu0 0
        %825 = vmatpush1.bf16.msra.mxu0 0
        %826 = vmatprep.subr.bf16.mxu0 0
        %827 = vmatpush1.bf16.msra.mxu0 0
        %828 = vmatprep.subr.bf16.mxu0 0
        %829 = vmatpush1.bf16.msra.mxu0 0
        %830 = vmatprep.subr.bf16.mxu0 0
        %831 = vmatpush1.bf16.msra.mxu0 0
        %832 = vmatprep.subr.bf16.mxu0 0
        %833 = vmatpush1.bf16.msra.mxu0 0
        %834 = vmatprep.subr.bf16.mxu0 0
        %835 = vmatpush1.bf16.msra.mxu0 0
        %836 = vmatprep.subr.bf16.mxu0 0
        %837 = vmatpush1.bf16.msra.mxu0 0
        %838 = vmatprep.subr.bf16.mxu0 0
        %839 = vmatpush1.bf16.msra.mxu0 0
        %840 = vmatprep.subr.bf16.mxu0 0
        %841 = vmatpush1.bf16.msra.mxu0 0
        %842 = vmatprep.subr.bf16.mxu0 0
        %843 = vmatpush1.bf16.msra.mxu0 0
        %844 = vmatprep.subr.bf16.mxu0 0
        %845 = vmatpush1.bf16.msra.mxu0 0
        %846 = vmatprep.mubr.bf16.mxu0 0
        %847 = vmatmul.mubr.bf16.gmra.mrb[0].mxu0 %v812
        %v848 = vpop.f32.mrb[0].mxu0
        %v849 = vadd.f32 %v808, %v848
        %v850 = vpop.f32.mrb[0].mxu0
        %v851 = vadd.f32 %v808, %v850
        %v852 = vpop.f32.mrb[0].mxu0
        %v853 = vpop.f32.mrb[0].mxu0
        %854 = vdwg.mxu0
        %v855 = vunpack.c.l.bf16 %v305
        %v856 = vunpack.c.h.bf16 %v305
        %v857 = vadd.f32 %v849, %v855
        %v858 = vadd.f32 %v851, %v856
        %859 = vst [vmem:[%s298] sm:$0xff] %v857
        %860 = vst [vmem:[%s298 + $0x8] sm:$0xff] %v858
        %s861 = sand.u32 %s203, 1
        %s862 = scalar_lea.sflag [#allocation3], %s861
        %s863 = sand.u32 %s203, 1
        %s864 = smul.addr %s863, 16
        %s865 = scalar_lea.vmem [#allocation2], %s864
        // Predicated region
        $region53: #{tpu_custom_call.1} parent=51 // pred_check
          %p866 = pneg %p213
        $region54: #{tpu_custom_call.1} parent=51 // pred_check_branch
          %868 = sbr.rel (%p866) target = $region56
        $region55: #{tpu_custom_call.1} parent=51 // pred_region
          %s870 = ssub.s32 256, 256
          %871 = vsyncadd %s862, %s870
          %s872 = smul.addr %s22, 2
          %s873 = smul.addr %s872, 128
          %s874 = scalar_lea.hbm %s8, %s873
          %s876 = sshll.u32 %s865, 4
          %s877 = int_to_ptr.vmem [resolvable:$true] %s876
          %879 = dma.vmem_to_hbm [thread:$0]  %s877, 256, %s874, %s862
        $region56: #{tpu_custom_call.1} parent=51 // pred_fallthru
          _
      $region52: #{tpu_custom_call.1} parent=5 // pred_fallthru
        _
      %p880 = scmp.le.s32.totalorder 2, %s17
      // Predicated region
      $region57: #{tpu_custom_call.1} parent=5 // pred_check
        %p881 = pneg %p880
      $region58: #{tpu_custom_call.1} parent=5 // pred_check_branch
        %883 = sbr.rel (%p881) target = $region60
      $region59: #{tpu_custom_call.1} parent=5 // pred_region
        %s884 = ssub.s32 %s17, 2
        // Predicated region
        $region61: #{tpu_custom_call.1} parent=59 // pred_check
          %p885 = pneg %p219
        $region62: #{tpu_custom_call.1} parent=59 // pred_check_branch
          %887 = sbr.rel (%p885) target = $region64
        $region63: #{tpu_custom_call.1} parent=59 // pred_region
          %s888 = sand.u32 %s204, 1
          %s889 = scalar_lea.sflag [#allocation3], %s888
          %s890 = sand.u32 %s204, 1
          %s891 = smul.addr %s890, 16
          %s892 = scalar_lea.vmem [#allocation2], %s891
          %893 = dma.done %s889, 256
        $region64: #{tpu_custom_call.1} parent=59 // pred_fallthru
          _
      $region60: #{tpu_custom_call.1} parent=5 // pred_fallthru
        _
    $region6: #{tpu_custom_call.1} parent=1 // loop_footer
      %s21 = sadd.s32 1, %s17
    $region7: #{tpu_custom_call.1} parent=1 // loop_footer_branch
      %16 = sbr.rel target = $region3
    $region8: #{tpu_custom_call.1} parent=1 // loop_exit
      _
    %894 = vsyncpa [#allocation3], 1
    %s895 = scalar_lea.sflag [#allocation3], 1
    %896 = vsyncpa %s895, 1

</llo_original>
